<compile_context>
chip_gen: v7x
topology: tpu7x:2x2x1
jax: 0.10.0
libtpu: 0.0.40
codegen_flags: <defaults>
</compile_context>

<pallas_src>
import functools

import jax
import jax.numpy as jnp
from jax.experimental import pallas as pl
from jax.experimental.pallas import tpu as pltpu


def kvg_kernel(x_ref, cw_ref, a_ref, w1_ref, w2_ref, o_ref, *, c, cr, hw, flat):
    # x_ref : (TB, c*hw) if flat else (TB, c, hw)   batch tile of the input
    # cw_ref: SMEM (c,)      1x1-conv weight (out_channels = 1, no bias)
    # a_ref : SMEM (1,)      PReLU slope (nn.PReLU default: single scalar)
    # w1_ref: SMEM (cr, c)   fc[0] Linear weight (out, in), no bias
    # w2_ref: SMEM (c, cr)   fc[2] Linear weight (out, in), no bias
    # o_ref : (TB, c)        gate output for this batch tile
    def chan(k):
        v = x_ref[:, k * hw:(k + 1) * hw] if flat else x_ref[:, k, :]
        return v.astype(jnp.float32)                       # (TB, hw)

    # 1x1 conv over channels -> spatial logits (scalar-broadcast FMAs on VPU)
    logits = cw_ref[0] * chan(0)
    for k in range(1, c):
        logits = logits + cw_ref[k] * chan(k)               # (TB, hw)

    # numerically stable softmax over the spatial dim, normalization deferred
    m = jnp.max(logits, axis=-1, keepdims=True)             # (TB, 1)
    e = jnp.exp(logits - m)                                  # (TB, hw)
    inv_s = pl.reciprocal(jnp.sum(e, axis=-1, keepdims=True))  # exact

    # y[:, k] = (sum_hw x_k * e) / sum_hw e   -- the torch.matmul(input_x, mask)
    y_cols = [jnp.sum(chan(k) * e, axis=-1, keepdims=True) * inv_s
              for k in range(c)]                             # c x (TB, 1)

    # fc: Linear(c -> cr) -> PReLU -> Linear(cr -> c) -> Sigmoid.
    # c / cr are tiny static ints: unrolled scalar-weight FMAs from SMEM.
    a = a_ref[0]
    h_cols = []
    for j in range(cr):
        acc = w1_ref[j, 0] * y_cols[0]
        for k in range(1, c):
            acc = acc + w1_ref[j, k] * y_cols[k]
        h_cols.append(jnp.where(acc >= 0, acc, a * acc))     # PReLU
    out_cols = []
    for i in range(c):
        acc = w2_ref[i, 0] * h_cols[0]
        for j in range(1, cr):
            acc = acc + w2_ref[i, j] * h_cols[j]
        out_cols.append(jax.nn.sigmoid(acc))                 # (TB, 1)

    out = jnp.concatenate(out_cols, axis=-1)                 # (TB, c)
    o_ref[...] = out.astype(o_ref.dtype)


def _round_up(v, m):
    return ((v + m - 1) // m) * m


def _vmem_limit_bytes():
    """Generation-aware scoped-VMEM limit: ~5/8 of physical VMEM
    (≈80 MiB on v5e/v6e's 128 MiB, ≈40 MiB on v7x's 64 MiB), capped."""
    try:
        phys = int(pltpu.get_tpu_info().vmem_capacity_bytes)
    except Exception:  # robust fallback if the query is unavailable
        phys = 64 << 20
    return int(min(phys * 5 // 8, 96 << 20))


def _pick_batch_tile(b, per_sample_block, per_sample_work, vmem_limit):
    """Batch-tile size.  Multiple of 8 (or == b when b <= 8).  Keeps
    2 x double-buffered x block + f32 intermediates within vmem_limit,
    caps a single x buffer at 16 MiB, and keeps >= 2 grid steps whenever
    the batch allows (so both v7x TensorCores get work)."""
    usable = max(1 << 20, vmem_limit - (2 << 20))            # misc headroom
    per_sample_total = 2 * per_sample_block + per_sample_work
    cap = usable // max(per_sample_total, 1)
    cap = min(cap, (16 << 20) // max(per_sample_block, 1))   # <=16 MiB / buffer
    cap = max(cap, 8)
    if b <= 8:
        return b
    tb = max(8, (min(cap, b) // 8) * 8)
    if tb >= b:                                              # force grid >= 2
        tb = max(8, ((b // 2) // 8) * 8)
    return tb


def kvg_forward(x, conv_w, w1, prelu_a, w2):
    """x: (b, c, h, w) NCHW.  conv_w: (1, c, 1, 1).  w1: (c//r, c).
    prelu_a: scalar.  w2: (c, c//r).  Returns (b, c) gate values."""
    b, c, h, w = x.shape
    hw = h * w
    cr = w1.shape[0]
    itemsize = jnp.dtype(x.dtype).itemsize

    # Fast path: flatten channels into the lane axis (free view) when hw is
    # already lane-aligned.  Otherwise keep an unpadded 3-D block (legal:
    # block dims equal the full array dims) and avoid a wrapper jnp.pad pass.
    flat = (hw % 128 == 0)
    hw_lane = _round_up(hw, 128)
    if flat:
        x_in = x.reshape(b, c * hw)
        per_sample_block = c * hw * itemsize                  # lane-dense
        x_spec = None  # set below with tb
    else:
        x_in = x.reshape(b, c, hw)
        per_sample_block = _round_up(c, 8) * hw_lane * itemsize  # sublane pad
    per_sample_work = 3 * hw_lane * 4                         # logits + e (f32)

    vmem_limit = _vmem_limit_bytes()
    tb = _pick_batch_tile(b, per_sample_block, per_sample_work, vmem_limit)
    grid = (pl.cdiv(b, tb),)

    if flat:
        x_spec = pl.BlockSpec((tb, c * hw), lambda i: (i, 0))
    else:
        x_spec = pl.BlockSpec((tb, c, hw), lambda i: (i, 0, 0))

    cw = conv_w.reshape(c).astype(jnp.float32)                # Conv2d(c,1,1x1)
    a = jnp.asarray(prelu_a, jnp.float32).reshape(1)
    w1s = w1.astype(jnp.float32)
    w2s = w2.astype(jnp.float32)

    out = pl.pallas_call(
        functools.partial(kvg_kernel, c=c, cr=cr, hw=hw, flat=flat),
        out_shape=jax.ShapeDtypeStruct((b, c), x.dtype),
        grid=grid,
        in_specs=[
            x_spec,                                                 # x tile
            pl.BlockSpec(memory_space=pltpu.MemorySpace.SMEM),      # conv w
            pl.BlockSpec(memory_space=pltpu.MemorySpace.SMEM),      # PReLU a
            pl.BlockSpec(memory_space=pltpu.MemorySpace.SMEM),      # fc[0] w
            pl.BlockSpec(memory_space=pltpu.MemorySpace.SMEM),      # fc[2] w
        ],
        out_specs=pl.BlockSpec((tb, c), lambda i: (i, 0)),          # gate
        compiler_params=pltpu.CompilerParams(
            dimension_semantics=("parallel",),
            vmem_limit_bytes=vmem_limit),
    )(x_in, cw, a, w1s, w2s)
    return out


def kvg_reference(x, conv_w, w1, prelu_a, w2):
    b, c, h, w = x.shape
    xf = x.reshape(b, c, h * w)
    logits = jnp.einsum("c,bck->bk", conv_w.reshape(c), xf)
    attn = jax.nn.softmax(logits, axis=-1)
    y = jnp.einsum("bck,bk->bc", xf, attn)
    h1 = y @ w1.T
    h1 = jnp.where(h1 >= 0, h1, prelu_a * h1)
    return jax.nn.sigmoid(h1 @ w2.T)


if __name__ == "__main__":
    # Shapes consistent with the module: num_direction (=channels) c=4,
    # reduction=2, batch=2, spatial 16x16.
    b, c, h, w = 2, 4, 16, 16
    reduction = 2
    cr = c // reduction

    key = jax.random.PRNGKey(0)
    kx, kc, k1, k2 = jax.random.split(key, 4)

    x = jax.random.normal(kx, (b, c, h, w), dtype=jnp.float32)
    conv_w = jax.random.normal(kc, (1, c, 1, 1), dtype=jnp.float32) * 0.1
    w1 = jax.random.normal(k1, (cr, c), dtype=jnp.float32) * 0.1   # Linear(c -> c//r)
    w2 = jax.random.normal(k2, (c, cr), dtype=jnp.float32) * 0.1   # Linear(c//r -> c)
    prelu_a = jnp.float32(0.25)                                    # nn.PReLU default

    out = kvg_forward(x, conv_w, w1, prelu_a, w2)
    jax.block_until_ready(out)

    ref = kvg_reference(x, conv_w, w1, prelu_a, w2)
    assert out.shape == (b, c)
    assert jnp.allclose(out, ref, rtol=1e-5, atol=1e-5), "mismatch vs reference"

    print("KERNEL_OK")
</pallas_src>

<mosaic_0001>
module attributes {stable_mosaic.version = 11 : i64} {
  func.func @kvg_kernel(%arg0: i32, %arg1: memref<2x1024xf32, #tpu.memory_space<vmem>>, %arg2: memref<4xf32, #tpu.memory_space<smem>>, %arg3: memref<1xf32, #tpu.memory_space<smem>>, %arg4: memref<2x4xf32, #tpu.memory_space<smem>>, %arg5: memref<4x2xf32, #tpu.memory_space<smem>>, %arg6: memref<2x4xf32, #tpu.memory_space<vmem>>) attributes {dimension_semantics = [#tpu.dimension_semantics<parallel>], iteration_bounds = array<i64: 1>, scalar_prefetch = 0 : i64, scratch_operands = 0 : i64, tpu.core_type = #tpu.core_type<tc>, window_params = [{transform_indices = @transform_0, window_bounds = array<i64: 2, 1024>}, {transform_indices = @transform_1, window_bounds = array<i64: 4>}, {transform_indices = @transform_2, window_bounds = array<i64: 1>}, {transform_indices = @transform_3, window_bounds = array<i64: 2, 4>}, {transform_indices = @transform_4, window_bounds = array<i64: 4, 2>}, {transform_indices = @transform_5, window_bounds = array<i64: 2, 4>}]} {
    %c0 = arith.constant 0 : index
    %0 = memref.load %arg2[%c0] : memref<4xf32, #tpu.memory_space<smem>>
    %c0_0 = arith.constant 0 : index
    %c0_1 = arith.constant 0 : index
    %1 = vector.load %arg1[%c0_0, %c0_1] : memref<2x1024xf32, #tpu.memory_space<vmem>>, vector<2x256xf32>
    %2 = vector.broadcast %0 : f32 to vector<2x256xf32>
    %3 = arith.mulf %2, %1 : vector<2x256xf32>
    %c1 = arith.constant 1 : index
    %4 = memref.load %arg2[%c1] : memref<4xf32, #tpu.memory_space<smem>>
    %c0_2 = arith.constant 0 : index
    %c256 = arith.constant 256 : index
    %5 = vector.load %arg1[%c0_2, %c256] : memref<2x1024xf32, #tpu.memory_space<vmem>>, vector<2x256xf32>
    %6 = vector.broadcast %4 : f32 to vector<2x256xf32>
    %7 = arith.mulf %6, %5 : vector<2x256xf32>
    %8 = arith.addf %3, %7 : vector<2x256xf32>
    %c2 = arith.constant 2 : index
    %9 = memref.load %arg2[%c2] : memref<4xf32, #tpu.memory_space<smem>>
    %c0_3 = arith.constant 0 : index
    %c512 = arith.constant 512 : index
    %10 = vector.load %arg1[%c0_3, %c512] : memref<2x1024xf32, #tpu.memory_space<vmem>>, vector<2x256xf32>
    %11 = vector.broadcast %9 : f32 to vector<2x256xf32>
    %12 = arith.mulf %11, %10 : vector<2x256xf32>
    %13 = arith.addf %8, %12 : vector<2x256xf32>
    %c3 = arith.constant 3 : index
    %14 = memref.load %arg2[%c3] : memref<4xf32, #tpu.memory_space<smem>>
    %c0_4 = arith.constant 0 : index
    %c768 = arith.constant 768 : index
    %15 = vector.load %arg1[%c0_4, %c768] : memref<2x1024xf32, #tpu.memory_space<vmem>>, vector<2x256xf32>
    %16 = vector.broadcast %14 : f32 to vector<2x256xf32>
    %17 = arith.mulf %16, %15 : vector<2x256xf32>
    %18 = arith.addf %13, %17 : vector<2x256xf32>
    %cst = arith.constant dense<0xFF800000> : vector<2xf32>
    %19 = vector.multi_reduction <maximumf>, %18, %cst [1] : vector<2x256xf32> to vector<2xf32>
    %20 = vector.shape_cast %19 : vector<2xf32> to vector<2x1xf32>
    %21 = vector.broadcast %20 : vector<2x1xf32> to vector<2x256xf32>
    %22 = arith.subf %18, %21 : vector<2x256xf32>
    %23 = math.exp %22 : vector<2x256xf32>
    %cst_5 = arith.constant dense<0.000000e+00> : vector<2xf32>
    %24 = vector.multi_reduction <add>, %23, %cst_5 [1] : vector<2x256xf32> to vector<2xf32>
    %25 = vector.shape_cast %24 : vector<2xf32> to vector<2x1xf32>
    %26 = tpu.reciprocal %25 : vector<2x1xf32> -> vector<2x1xf32>
    %c0_6 = arith.constant 0 : index
    %c0_7 = arith.constant 0 : index
    %27 = vector.load %arg1[%c0_6, %c0_7] : memref<2x1024xf32, #tpu.memory_space<vmem>>, vector<2x256xf32>
    %28 = arith.mulf %27, %23 : vector<2x256xf32>
    %cst_8 = arith.constant dense<0.000000e+00> : vector<2xf32>
    %29 = vector.multi_reduction <add>, %28, %cst_8 [1] : vector<2x256xf32> to vector<2xf32>
    %30 = vector.shape_cast %29 : vector<2xf32> to vector<2x1xf32>
    %31 = arith.mulf %30, %26 : vector<2x1xf32>
    %c0_9 = arith.constant 0 : index
    %c256_10 = arith.constant 256 : index
    %32 = vector.load %arg1[%c0_9, %c256_10] : memref<2x1024xf32, #tpu.memory_space<vmem>>, vector<2x256xf32>
    %33 = arith.mulf %32, %23 : vector<2x256xf32>
    %cst_11 = arith.constant dense<0.000000e+00> : vector<2xf32>
    %34 = vector.multi_reduction <add>, %33, %cst_11 [1] : vector<2x256xf32> to vector<2xf32>
    %35 = vector.shape_cast %34 : vector<2xf32> to vector<2x1xf32>
    %36 = arith.mulf %35, %26 : vector<2x1xf32>
    %c0_12 = arith.constant 0 : index
    %c512_13 = arith.constant 512 : index
    %37 = vector.load %arg1[%c0_12, %c512_13] : memref<2x1024xf32, #tpu.memory_space<vmem>>, vector<2x256xf32>
    %38 = arith.mulf %37, %23 : vector<2x256xf32>
    %cst_14 = arith.constant dense<0.000000e+00> : vector<2xf32>
    %39 = vector.multi_reduction <add>, %38, %cst_14 [1] : vector<2x256xf32> to vector<2xf32>
    %40 = vector.shape_cast %39 : vector<2xf32> to vector<2x1xf32>
    %41 = arith.mulf %40, %26 : vector<2x1xf32>
    %c0_15 = arith.constant 0 : index
    %c768_16 = arith.constant 768 : index
    %42 = vector.load %arg1[%c0_15, %c768_16] : memref<2x1024xf32, #tpu.memory_space<vmem>>, vector<2x256xf32>
    %43 = arith.mulf %42, %23 : vector<2x256xf32>
    %cst_17 = arith.constant dense<0.000000e+00> : vector<2xf32>
    %44 = vector.multi_reduction <add>, %43, %cst_17 [1] : vector<2x256xf32> to vector<2xf32>
    %45 = vector.shape_cast %44 : vector<2xf32> to vector<2x1xf32>
    %46 = arith.mulf %45, %26 : vector<2x1xf32>
    %c0_18 = arith.constant 0 : index
    %47 = memref.load %arg3[%c0_18] : memref<1xf32, #tpu.memory_space<smem>>
    %c0_19 = arith.constant 0 : index
    %c0_20 = arith.constant 0 : index
    %48 = memref.load %arg4[%c0_19, %c0_20] : memref<2x4xf32, #tpu.memory_space<smem>>
    %49 = vector.broadcast %48 : f32 to vector<2x1xf32>
    %50 = arith.mulf %49, %31 : vector<2x1xf32>
    %c0_21 = arith.constant 0 : index
    %c1_22 = arith.constant 1 : index
    %51 = memref.load %arg4[%c0_21, %c1_22] : memref<2x4xf32, #tpu.memory_space<smem>>
    %52 = vector.broadcast %51 : f32 to vector<2x1xf32>
    %53 = arith.mulf %52, %36 : vector<2x1xf32>
    %54 = arith.addf %50, %53 : vector<2x1xf32>
    %c0_23 = arith.constant 0 : index
    %c2_24 = arith.constant 2 : index
    %55 = memref.load %arg4[%c0_23, %c2_24] : memref<2x4xf32, #tpu.memory_space<smem>>
    %56 = vector.broadcast %55 : f32 to vector<2x1xf32>
    %57 = arith.mulf %56, %41 : vector<2x1xf32>
    %58 = arith.addf %54, %57 : vector<2x1xf32>
    %c0_25 = arith.constant 0 : index
    %c3_26 = arith.constant 3 : index
    %59 = memref.load %arg4[%c0_25, %c3_26] : memref<2x4xf32, #tpu.memory_space<smem>>
    %60 = vector.broadcast %59 : f32 to vector<2x1xf32>
    %61 = arith.mulf %60, %46 : vector<2x1xf32>
    %62 = arith.addf %58, %61 : vector<2x1xf32>
    %cst_27 = arith.constant 0.000000e+00 : f32
    %63 = vector.broadcast %cst_27 : f32 to vector<2x1xf32>
    %64 = arith.cmpf oge, %62, %63 : vector<2x1xf32>
    %65 = vector.broadcast %47 : f32 to vector<2x1xf32>
    %66 = arith.mulf %65, %62 : vector<2x1xf32>
    %67 = arith.select %64, %62, %66 : vector<2x1xi1>, vector<2x1xf32>
    %c1_28 = arith.constant 1 : index
    %c0_29 = arith.constant 0 : index
    %68 = memref.load %arg4[%c1_28, %c0_29] : memref<2x4xf32, #tpu.memory_space<smem>>
    %69 = vector.broadcast %68 : f32 to vector<2x1xf32>
    %70 = arith.mulf %69, %31 : vector<2x1xf32>
    %c1_30 = arith.constant 1 : index
    %c1_31 = arith.constant 1 : index
    %71 = memref.load %arg4[%c1_30, %c1_31] : memref<2x4xf32, #tpu.memory_space<smem>>
    %72 = vector.broadcast %71 : f32 to vector<2x1xf32>
    %73 = arith.mulf %72, %36 : vector<2x1xf32>
    %74 = arith.addf %70, %73 : vector<2x1xf32>
    %c1_32 = arith.constant 1 : index
    %c2_33 = arith.constant 2 : index
    %75 = memref.load %arg4[%c1_32, %c2_33] : memref<2x4xf32, #tpu.memory_space<smem>>
    %76 = vector.broadcast %75 : f32 to vector<2x1xf32>
    %77 = arith.mulf %76, %41 : vector<2x1xf32>
    %78 = arith.addf %74, %77 : vector<2x1xf32>
    %c1_34 = arith.constant 1 : index
    %c3_35 = arith.constant 3 : index
    %79 = memref.load %arg4[%c1_34, %c3_35] : memref<2x4xf32, #tpu.memory_space<smem>>
    %80 = vector.broadcast %79 : f32 to vector<2x1xf32>
    %81 = arith.mulf %80, %46 : vector<2x1xf32>
    %82 = arith.addf %78, %81 : vector<2x1xf32>
    %cst_36 = arith.constant 0.000000e+00 : f32
    %83 = vector.broadcast %cst_36 : f32 to vector<2x1xf32>
    %84 = arith.cmpf oge, %82, %83 : vector<2x1xf32>
    %85 = vector.broadcast %47 : f32 to vector<2x1xf32>
    %86 = arith.mulf %85, %82 : vector<2x1xf32>
    %87 = arith.select %84, %82, %86 : vector<2x1xi1>, vector<2x1xf32>
    %c0_37 = arith.constant 0 : index
    %c0_38 = arith.constant 0 : index
    %88 = memref.load %arg5[%c0_37, %c0_38] : memref<4x2xf32, #tpu.memory_space<smem>>
    %89 = vector.broadcast %88 : f32 to vector<2x1xf32>
    %90 = arith.mulf %89, %67 : vector<2x1xf32>
    %c0_39 = arith.constant 0 : index
    %c1_40 = arith.constant 1 : index
    %91 = memref.load %arg5[%c0_39, %c1_40] : memref<4x2xf32, #tpu.memory_space<smem>>
    %92 = vector.broadcast %91 : f32 to vector<2x1xf32>
    %93 = arith.mulf %92, %87 : vector<2x1xf32>
    %94 = arith.addf %90, %93 : vector<2x1xf32>
    %95 = arith.negf %94 : vector<2x1xf32>
    %96 = math.exp %95 : vector<2x1xf32>
    %cst_41 = arith.constant 1.000000e+00 : f32
    %97 = vector.broadcast %cst_41 : f32 to vector<2x1xf32>
    %98 = arith.addf %97, %96 : vector<2x1xf32>
    %99 = arith.divf %97, %98 : vector<2x1xf32>
    %c1_42 = arith.constant 1 : index
    %c0_43 = arith.constant 0 : index
    %100 = memref.load %arg5[%c1_42, %c0_43] : memref<4x2xf32, #tpu.memory_space<smem>>
    %101 = vector.broadcast %100 : f32 to vector<2x1xf32>
    %102 = arith.mulf %101, %67 : vector<2x1xf32>
    %c1_44 = arith.constant 1 : index
    %c1_45 = arith.constant 1 : index
    %103 = memref.load %arg5[%c1_44, %c1_45] : memref<4x2xf32, #tpu.memory_space<smem>>
    %104 = vector.broadcast %103 : f32 to vector<2x1xf32>
    %105 = arith.mulf %104, %87 : vector<2x1xf32>
    %106 = arith.addf %102, %105 : vector<2x1xf32>
    %107 = arith.negf %106 : vector<2x1xf32>
    %108 = math.exp %107 : vector<2x1xf32>
    %cst_46 = arith.constant 1.000000e+00 : f32
    %109 = vector.broadcast %cst_46 : f32 to vector<2x1xf32>
    %110 = arith.addf %109, %108 : vector<2x1xf32>
    %111 = arith.divf %109, %110 : vector<2x1xf32>
    %c2_47 = arith.constant 2 : index
    %c0_48 = arith.constant 0 : index
    %112 = memref.load %arg5[%c2_47, %c0_48] : memref<4x2xf32, #tpu.memory_space<smem>>
    %113 = vector.broadcast %112 : f32 to vector<2x1xf32>
    %114 = arith.mulf %113, %67 : vector<2x1xf32>
    %c2_49 = arith.constant 2 : index
    %c1_50 = arith.constant 1 : index
    %115 = memref.load %arg5[%c2_49, %c1_50] : memref<4x2xf32, #tpu.memory_space<smem>>
    %116 = vector.broadcast %115 : f32 to vector<2x1xf32>
    %117 = arith.mulf %116, %87 : vector<2x1xf32>
    %118 = arith.addf %114, %117 : vector<2x1xf32>
    %119 = arith.negf %118 : vector<2x1xf32>
    %120 = math.exp %119 : vector<2x1xf32>
    %cst_51 = arith.constant 1.000000e+00 : f32
    %121 = vector.broadcast %cst_51 : f32 to vector<2x1xf32>
    %122 = arith.addf %121, %120 : vector<2x1xf32>
    %123 = arith.divf %121, %122 : vector<2x1xf32>
    %c3_52 = arith.constant 3 : index
    %c0_53 = arith.constant 0 : index
    %124 = memref.load %arg5[%c3_52, %c0_53] : memref<4x2xf32, #tpu.memory_space<smem>>
    %125 = vector.broadcast %124 : f32 to vector<2x1xf32>
    %126 = arith.mulf %125, %67 : vector<2x1xf32>
    %c3_54 = arith.constant 3 : index
    %c1_55 = arith.constant 1 : index
    %127 = memref.load %arg5[%c3_54, %c1_55] : memref<4x2xf32, #tpu.memory_space<smem>>
    %128 = vector.broadcast %127 : f32 to vector<2x1xf32>
    %129 = arith.mulf %128, %87 : vector<2x1xf32>
    %130 = arith.addf %126, %129 : vector<2x1xf32>
    %131 = arith.negf %130 : vector<2x1xf32>
    %132 = math.exp %131 : vector<2x1xf32>
    %cst_56 = arith.constant 1.000000e+00 : f32
    %133 = vector.broadcast %cst_56 : f32 to vector<2x1xf32>
    %134 = arith.addf %133, %132 : vector<2x1xf32>
    %135 = arith.divf %133, %134 : vector<2x1xf32>
    %136 = tpu.concatenate %99, %111, %123, %135 in 1 : vector<2x1xf32>, vector<2x1xf32>, vector<2x1xf32>, vector<2x1xf32> -> vector<2x4xf32>
    %c0_57 = arith.constant 0 : index
    %c0_58 = arith.constant 0 : index
    %137 = vector.load %arg6[%c0_57, %c0_58] : memref<2x4xf32, #tpu.memory_space<vmem>>, vector<2x4xf32>
    tpu.vector_store %arg6[%c0_57, %c0_58], %136 {strides = array<i32>} : memref<2x4xf32, #tpu.memory_space<vmem>>, vector<2x4xf32>,
    return
  }
  func.func @transform_0(%arg0: i32) -> (i32, i32) {
    %c0_i32 = arith.constant 0 : i32
    %c0_i32_0 = arith.constant 0 : i32
    return %arg0, %c0_i32 : i32, i32
  }
  func.func @transform_1(%arg0: i32) -> i32 {
    %c0_i32 = arith.constant 0 : i32
    %c0_i32_0 = arith.constant 0 : i32
    return %c0_i32 : i32
  }
  func.func @transform_2(%arg0: i32) -> i32 {
    %c0_i32 = arith.constant 0 : i32
    %c0_i32_0 = arith.constant 0 : i32
    return %c0_i32 : i32
  }
  func.func @transform_3(%arg0: i32) -> (i32, i32) {
    %c0_i32 = arith.constant 0 : i32
    %c0_i32_0 = arith.constant 0 : i32
    %c0_i32_1 = arith.constant 0 : i32
    return %c0_i32, %c0_i32_0 : i32, i32
  }
  func.func @transform_4(%arg0: i32) -> (i32, i32) {
    %c0_i32 = arith.constant 0 : i32
    %c0_i32_0 = arith.constant 0 : i32
    %c0_i32_1 = arith.constant 0 : i32
    return %c0_i32, %c0_i32_0 : i32, i32
  }
  func.func @transform_5(%arg0: i32) -> (i32, i32) {
    %c0_i32 = arith.constant 0 : i32
    %c0_i32_0 = arith.constant 0 : i32
    return %arg0, %c0_i32 : i32, i32
  }
}

</mosaic_0001>

<llo_original>
// kernel: tpu_custom_call.1
$region0: #{tpu_custom_call.1}
  #allocation0 [shape = 'u32[]', space=smem, size = 0x4, offset = 0x4, fixed_abs, tag = 'smem constant byte address 0x4 - core index']
  #allocation1 [shape = 'u32[144,128]{1,0:T(1,128)}', space=vmem, size = 0x12000, scoped, tag = 'internal scratch']
  #allocation2 [shape = 'f32[1]{0:T(128)S(6)}', space=smem, size = 0x200, scoped, tag = 'scoped memory for tpu_custom_call.1']
  %s0 = inlined_call_operand.hbm [shape: f32[2,1024], index: 0, kind: input, shape index: {}]
  %s1 = inlined_call_operand.vmem [shape: f32[4], index: 1, kind: input, shape index: {}]
  %s2 = inlined_call_operand.<no memory space> [shape: f32[1], index: 2, kind: input, shape index: {}]
  %s3 = inlined_call_operand.vmem [shape: f32[2,4], index: 3, kind: input, shape index: {}]
  %s4 = inlined_call_operand.vmem [shape: f32[4,2], index: 4, kind: input, shape index: {}]
  %s5 = inlined_call_operand.hbm [shape: f32[2,4], index: 5, kind: output, shape index: {}]
  %s6 = sld [smem:[#allocation0]]
  $region46: #{tpu_custom_call.1} parent=0
    _
  %s8 = ssub.s32 1, %s6
  %s9 = scalar_select 0, %s8, %s6
  %10 = sst [smem:[#allocation2]] %s2
  $region1: #{tpu_custom_call.1} parent=0
    #allocation3 [shape = 'u8[8192]{0}', space=vmem, size = 0x2000, scoped, tag = 'input window, operand 0, single buffered']
    #allocation4 [shape = 's32[1]{0}', space=sflag, size = 0x4, scoped, tag = 'scoped memory for tpu_custom_call.1']
    #allocation5 [shape = 's32[1]{0}', space=sflag, size = 0x4, scoped, tag = 'scoped memory for tpu_custom_call.1']
    #allocation6 [shape = 's32[1]{0}', space=sflag, size = 0x4, scoped, tag = 'scoped memory for tpu_custom_call.1']
    #allocation7 [shape = 'u8[512]{0}', space=smem, size = 0x200, scoped, tag = 'input window, operand 1, single buffered']
    #allocation8 [shape = 'u8[1024]{0}', space=smem, size = 0x400, scoped, tag = 'input window, operand 3, single buffered']
    #allocation9 [shape = 's32[1]{0}', space=sflag, size = 0x4, scoped, tag = 'scoped memory for tpu_custom_call.1']
    #allocation10 [shape = 'u8[2048]{0}', space=smem, size = 0x800, scoped, tag = 'input window, operand 4, single buffered']
    #allocation11 [shape = 'u8[1024]{0}', space=vmem, size = 0x400, scoped, tag = 'output window, operand 0, single buffered']
    %11 = vsyncpa [#allocation4], 0
    %12 = vsyncpa [#allocation6], 0
    %13 = vsyncpa [#allocation9], 0
    %14 = vsyncpa [#allocation5], 0
    // Predicated region
    $region2: #{tpu_custom_call.1} parent=1 // pred_check
      _
    $region3: #{tpu_custom_call.1} parent=1 // pred_check_branch
      %16 = sbr.rel (0) target = $region5
    $region4: #{tpu_custom_call.1} parent=1 // pred_region
      %s18 = ssub.s32 256, 256
      %19 = vsyncadd [#allocation4], %s18
      %s21 = sshll.u32 [#allocation3], 4
      %s22 = int_to_ptr.vmem [resolvable:$true] %s21
      %24 = dma.hbm_to_vmem [thread:$0]  %s0, 256, %s22, [#allocation4]
    $region5: #{tpu_custom_call.1} parent=1 // pred_fallthru
      _
    // Predicated region
    $region6: #{tpu_custom_call.1} parent=1 // pred_check
      _
    $region7: #{tpu_custom_call.1} parent=1 // pred_check_branch
      %26 = sbr.rel (0) target = $region9
    $region8: #{tpu_custom_call.1} parent=1 // pred_region
      %s28 = ssub.s32 16, 16
      %29 = vsyncadd [#allocation6], %s28
      %s31 = sshll.u32 %s1, 4
      %s32 = int_to_ptr.vmem [resolvable:$true] %s31
      %34 = dma.vmem_to_smem %s32, 16, [#allocation7], [#allocation6]
    $region9: #{tpu_custom_call.1} parent=1 // pred_fallthru
      _
    // Predicated region
    $region10: #{tpu_custom_call.1} parent=1 // pred_check
      _
    $region11: #{tpu_custom_call.1} parent=1 // pred_check_branch
      %36 = sbr.rel (0) target = $region13
    $region12: #{tpu_custom_call.1} parent=1 // pred_region
      _
    $region13: #{tpu_custom_call.1} parent=1 // pred_fallthru
      _
    // Predicated region
    $region14: #{tpu_custom_call.1} parent=1 // pred_check
      _
    $region15: #{tpu_custom_call.1} parent=1 // pred_check_branch
      %38 = sbr.rel (0) target = $region17
    $region16: #{tpu_custom_call.1} parent=1 // pred_region
      %s40 = ssub.s32 32, 32
      %41 = vsyncadd [#allocation9], %s40
      %s43 = sshll.u32 %s3, 4
      %s44 = int_to_ptr.vmem [resolvable:$true] %s43
      %46 = dma.vmem_to_smem %s44, 32, [#allocation8], [#allocation9]
    $region17: #{tpu_custom_call.1} parent=1 // pred_fallthru
      _
    // Predicated region
    $region18: #{tpu_custom_call.1} parent=1 // pred_check
      _
    $region19: #{tpu_custom_call.1} parent=1 // pred_check_branch
      %48 = sbr.rel (0) target = $region21
    $region20: #{tpu_custom_call.1} parent=1 // pred_region
      %s50 = ssub.s32 64, 64
      %51 = vsyncadd [#allocation9], %s50
      %s53 = sshll.u32 %s4, 4
      %s54 = int_to_ptr.vmem [resolvable:$true] %s53
      %56 = dma.vmem_to_smem %s54, 64, [#allocation10], [#allocation9]
    $region21: #{tpu_custom_call.1} parent=1 // pred_fallthru
      _
    // Predicated region
    $region22: #{tpu_custom_call.1} parent=1 // pred_check
      _
    $region23: #{tpu_custom_call.1} parent=1 // pred_check_branch
      %58 = sbr.rel (0) target = $region25
    $region24: #{tpu_custom_call.1} parent=1 // pred_region
      %59 = dma.done [#allocation4], 256
    $region25: #{tpu_custom_call.1} parent=1 // pred_fallthru
      _
    // Predicated region
    $region26: #{tpu_custom_call.1} parent=1 // pred_check
      _
    $region27: #{tpu_custom_call.1} parent=1 // pred_check_branch
      %61 = sbr.rel (0) target = $region29
    $region28: #{tpu_custom_call.1} parent=1 // pred_region
      %62 = dma.done [#allocation6], 16
    $region29: #{tpu_custom_call.1} parent=1 // pred_fallthru
      _
    // Predicated region
    $region30: #{tpu_custom_call.1} parent=1 // pred_check
      _
    $region31: #{tpu_custom_call.1} parent=1 // pred_check_branch
      %64 = sbr.rel (0) target = $region33
    $region32: #{tpu_custom_call.1} parent=1 // pred_region
      %65 = dma.done [#allocation9], 32
    $region33: #{tpu_custom_call.1} parent=1 // pred_fallthru
      _
    // Predicated region
    $region34: #{tpu_custom_call.1} parent=1 // pred_check
      _
    $region35: #{tpu_custom_call.1} parent=1 // pred_check_branch
      %67 = sbr.rel (0) target = $region37
    $region36: #{tpu_custom_call.1} parent=1 // pred_region
      %68 = dma.done [#allocation9], 64
    $region37: #{tpu_custom_call.1} parent=1 // pred_fallthru
      _
    %69 = sfence
    %s70 = sld [smem:[#allocation7]]
    %v71 = vld [vmem:[#allocation3] sm:$0xf]
    %v72 = vstv %s70
    %v73 = vmul.f32 %v72, %v71
    %s74 = sld [smem:[#allocation7 + $0x1]]
    %v75 = vld [vmem:[#allocation3 + $0x4] sm:$0xf]
    %v76 = vstv %s74
    %v77 = vmul.f32 %v76, %v75
    %v78 = vadd.f32 %v73, %v77
    %s79 = sld [smem:[#allocation7 + $0x2]]
    %v80 = vld [vmem:[#allocation3 + $0x8] sm:$0xf]
    %v81 = vstv %s79
    %v82 = vmul.f32 %v81, %v80
    %v83 = vadd.f32 %v78, %v82
    %s84 = sld [smem:[#allocation7 + $0x3]]
    %v85 = vld [vmem:[#allocation3 + $0xc] sm:$0xf]
    %v86 = vstv %s84
    %v87 = vmul.f32 %v86, %v85
    %v88 = vadd.f32 %v83, %v87
    %v91 = vunpack.c.l.s4 1983009808
    %v92 = vunpack.c.0.s8 %v91
    %v93 = vlaneseq
    %v94 = vshrl.u32 %v93, 7
    %v95 = vsub.s32 %v92, %v94
    %v96 = vrot.slane %v88, %v95
    %v97 = vcombine.high %v96, %v96
    %vm100 = vcmask 1041408
    %v101 = vsel %vm100, %v96, -inf
    %v102 = vsel %vm100, %v97, -inf
    %v103 = vmax.f32 %v101, %v102
    %104 = vmax.xlane.f32.xlu0 %v103
    %v105 = vpop.xlane.xlu0 %104
    %v108 = vunpack.c.l.s4 269488144
    %v109 = vunpack.c.0.s8 %v108
    %v110 = vlaneseq
    %v111 = vshrl.u32 %v110, 7
    %v112 = vsub.s32 %v109, %v111
    %v113 = vrot.slane %v105, %v112
    %v115 = vsub.f32 %v88, %v113
    %v116 = vmul.f32 %v115, 1.442695
    %v117 = vpow.pop %v116
    %v120 = vunpack.c.l.s4 1983009808
    %v121 = vunpack.c.0.s8 %v120
    %v122 = vlaneseq
    %v123 = vshrl.u32 %v122, 7
    %v124 = vsub.s32 %v121, %v123
    %v125 = vrot.slane %v117, %v124
    %v126 = vcombine.high %v125, %v125
    %v129 = vsel %vm100, %v125, 0.0
    %v130 = vsel %vm100, %v126, 0.0
    %v131 = vadd.f32 %v129, %v130
    %132 = vadd.xlane.f32.xlu0 %v131
    %v133 = vpop.xlane.xlu0 %132
    %v134 = vrcp.pop %v133
    %v135 = vmul.f32 %v71, %v117
    %v138 = vunpack.c.l.s4 1983009808
    %v139 = vunpack.c.0.s8 %v138
    %v140 = vlaneseq
    %v141 = vshrl.u32 %v140, 7
    %v142 = vsub.s32 %v139, %v141
    %v143 = vrot.slane %v135, %v142
    %v144 = vcombine.high %v143, %v143
    %v147 = vsel %vm100, %v143, 0.0
    %v148 = vsel %vm100, %v144, 0.0
    %v149 = vadd.f32 %v147, %v148
    %150 = vadd.xlane.f32.xlu0 %v149
    %v151 = vpop.xlane.xlu0 %150
    %v152 = vmul.f32 %v151, %v134
    %v153 = vmul.f32 %v75, %v117
    %v156 = vunpack.c.l.s4 1983009808
    %v157 = vunpack.c.0.s8 %v156
    %v158 = vlaneseq
    %v159 = vshrl.u32 %v158, 7
    %v160 = vsub.s32 %v157, %v159
    %v161 = vrot.slane %v153, %v160
    %v162 = vcombine.high %v161, %v161
    %v165 = vsel %vm100, %v161, 0.0
    %v166 = vsel %vm100, %v162, 0.0
    %v167 = vadd.f32 %v165, %v166
    %168 = vadd.xlane.f32.xlu0 %v167
    %v169 = vpop.xlane.xlu0 %168
    %v170 = vmul.f32 %v169, %v134
    %v171 = vmul.f32 %v80, %v117
    %v174 = vunpack.c.l.s4 1983009808
    %v175 = vunpack.c.0.s8 %v174
    %v176 = vlaneseq
    %v177 = vshrl.u32 %v176, 7
    %v178 = vsub.s32 %v175, %v177
    %v179 = vrot.slane %v171, %v178
    %v180 = vcombine.high %v179, %v179
    %v183 = vsel %vm100, %v179, 0.0
    %v184 = vsel %vm100, %v180, 0.0
    %v185 = vadd.f32 %v183, %v184
    %186 = vadd.xlane.f32.xlu0 %v185
    %v187 = vpop.xlane.xlu0 %186
    %v188 = vmul.f32 %v187, %v134
    %v189 = vmul.f32 %v85, %v117
    %v192 = vunpack.c.l.s4 1983009808
    %v193 = vunpack.c.0.s8 %v192
    %v194 = vlaneseq
    %v195 = vshrl.u32 %v194, 7
    %v196 = vsub.s32 %v193, %v195
    %v197 = vrot.slane %v189, %v196
    %v198 = vcombine.high %v197, %v197
    %v201 = vsel %vm100, %v197, 0.0
    %v202 = vsel %vm100, %v198, 0.0
    %v203 = vadd.f32 %v201, %v202
    %204 = vadd.xlane.f32.xlu0 %v203
    %v205 = vpop.xlane.xlu0 %204
    %v206 = vmul.f32 %v205, %v134
    %s207 = sld [smem:[#allocation2]]
    %s208 = sld [smem:[#allocation8]]
    %v209 = vstv %s208
    %v210 = vmul.f32 %v209, %v152
    %s211 = sld [smem:[#allocation8 + $0x1]]
    %v212 = vstv %s211
    %v213 = vmul.f32 %v212, %v170
    %v214 = vadd.f32 %v210, %v213
    %s215 = sld [smem:[#allocation8 + $0x2]]
    %v216 = vstv %s215
    %v217 = vmul.f32 %v216, %v188
    %v218 = vadd.f32 %v214, %v217
    %s219 = sld [smem:[#allocation8 + $0x3]]
    %v220 = vstv %s219
    %v221 = vmul.f32 %v220, %v206
    %v222 = vadd.f32 %v218, %v221
    %vm223 = vcmp.ge.f32.partialorder %v222, 0.0
    %v224 = vstv %s207
    %v225 = vmul.f32 %v224, %v222
    %v226 = vsel %vm223, %v222, %v225
    %s227 = sld [smem:[#allocation8 + $0x80]]
    %v228 = vstv %s227
    %v229 = vmul.f32 %v228, %v152
    %s230 = sld [smem:[#allocation8 + $0x81]]
    %v231 = vstv %s230
    %v232 = vmul.f32 %v231, %v170
    %v233 = vadd.f32 %v229, %v232
    %s234 = sld [smem:[#allocation8 + $0x82]]
    %v235 = vstv %s234
    %v236 = vmul.f32 %v235, %v188
    %v237 = vadd.f32 %v233, %v236
    %s238 = sld [smem:[#allocation8 + $0x83]]
    %v239 = vstv %s238
    %v240 = vmul.f32 %v239, %v206
    %v241 = vadd.f32 %v237, %v240
    %vm242 = vcmp.ge.f32.partialorder %v241, 0.0
    %v243 = vmul.f32 %v224, %v241
    %v244 = vsel %vm242, %v241, %v243
    %s245 = sld [smem:[#allocation10]]
    %v246 = vstv %s245
    %v247 = vmul.f32 %v246, %v226
    %s248 = sld [smem:[#allocation10 + $0x1]]
    %v249 = vstv %s248
    %v250 = vmul.f32 %v249, %v244
    %v251 = vadd.f32 %v247, %v250
    %v252 = vxor.u32 %v251, 2147483648
    %v253 = vmul.f32 %v252, 1.442695
    %v254 = vpow.pop %v253
    %v255 = vadd.f32 %v254, 1.0
    %v256 = vrcp.pop %v255
    %v257 = vmul.f32 1.0, %v256
    %s258 = sld [smem:[#allocation10 + $0x80]]
    %v259 = vstv %s258
    %v260 = vmul.f32 %v259, %v226
    %s261 = sld [smem:[#allocation10 + $0x81]]
    %v262 = vstv %s261
    %v263 = vmul.f32 %v262, %v244
    %v264 = vadd.f32 %v260, %v263
    %v265 = vxor.u32 %v264, 2147483648
    %v266 = vmul.f32 %v265, 1.442695
    %v267 = vpow.pop %v266
    %v268 = vadd.f32 %v267, 1.0
    %v269 = vrcp.pop %v268
    %v270 = vmul.f32 1.0, %v269
    %s271 = sld [smem:[#allocation10 + $0x100]]
    %v272 = vstv %s271
    %v273 = vmul.f32 %v272, %v226
    %s274 = sld [smem:[#allocation10 + $0x101]]
    %v275 = vstv %s274
    %v276 = vmul.f32 %v275, %v244
    %v277 = vadd.f32 %v273, %v276
    %v278 = vxor.u32 %v277, 2147483648
    %v279 = vmul.f32 %v278, 1.442695
    %v280 = vpow.pop %v279
    %v281 = vadd.f32 %v280, 1.0
    %v282 = vrcp.pop %v281
    %v283 = vmul.f32 1.0, %v282
    %s284 = sld [smem:[#allocation10 + $0x180]]
    %v285 = vstv %s284
    %v286 = vmul.f32 %v285, %v226
    %s287 = sld [smem:[#allocation10 + $0x181]]
    %v288 = vstv %s287
    %v289 = vmul.f32 %v288, %v244
    %v290 = vadd.f32 %v286, %v289
    %v291 = vxor.u32 %v290, 2147483648
    %v292 = vmul.f32 %v291, 1.442695
    %v293 = vpow.pop %v292
    %v294 = vadd.f32 %v293, 1.0
    %v295 = vrcp.pop %v294
    %v296 = vmul.f32 1.0, %v295
    %vm297 = vcmask 7168
    %v298 = vsel %vm297, %v257, %v270
    %vm299 = vcmask 15360
    %v300 = vsel %vm299, %v298, %v283
    %vm301 = vcmask 23552
    %v302 = vsel %vm301, %v300, %v296
    %vm303 = vcmask 25600
    %304 = vst.msk [vmem:[#allocation11] sm:$0x3] %vm303, %v302
    // Predicated region
    $region38: #{tpu_custom_call.1} parent=1 // pred_check
      _
    $region39: #{tpu_custom_call.1} parent=1 // pred_check_branch
      %306 = sbr.rel (0) target = $region41
    $region40: #{tpu_custom_call.1} parent=1 // pred_region
      %s308 = ssub.s32 32, 32
      %309 = vsyncadd [#allocation5], %s308
      %s311 = sshll.u32 [#allocation11], 4
      %s312 = int_to_ptr.vmem [resolvable:$true] %s311
      %314 = dma.vmem_to_hbm [thread:$0]  %s312, 32, %s5, [#allocation5]
    $region41: #{tpu_custom_call.1} parent=1 // pred_fallthru
      _
    // Predicated region
    $region42: #{tpu_custom_call.1} parent=1 // pred_check
      _
    $region43: #{tpu_custom_call.1} parent=1 // pred_check_branch
      %316 = sbr.rel (0) target = $region45
    $region44: #{tpu_custom_call.1} parent=1 // pred_region
      %317 = dma.done [#allocation5], 32
    $region45: #{tpu_custom_call.1} parent=1 // pred_fallthru
      _
    %318 = vsyncpa [#allocation4], 1
    %319 = vsyncpa [#allocation5], 1
    %320 = vsyncpa [#allocation6], 1
    %321 = vsyncpa [#allocation9], 1

</llo_original>
